<compile_context>
chip_gen: v5e
topology: v5e:2x2
jax: 0.10.0
libtpu: 0.0.40
codegen_flags: <defaults>
</compile_context>

<pallas_src>
import jax
import jax.numpy as jnp
import numpy as np
from jax.experimental import pallas as pl
from jax.experimental.pallas import tpu as pltpu


_VMEM_LIMIT = 48 * 1024 * 1024  # explicit scoped-VMEM budget, safe on v5e/v6e and v7x (64 MiB)


# ---------------------------------------------------------------------------
# Pallas kernels
# ---------------------------------------------------------------------------
def _conv_stats_kernel(p_ref, w_ref, s1_ref, s2_ref):
    """Pass 1: accumulate per-channel sum / sum-of-squares of the conv output."""
    @pl.when(pl.program_id(0) == 0)
    def _():
        s1_ref[...] = jnp.zeros_like(s1_ref)
        s2_ref[...] = jnp.zeros_like(s2_ref)

    w = w_ref[...]
    s1 = s1_ref[...]
    s2 = s2_ref[...]
    for k in range(4):                      # four (p, q) polyphase row blocks
        c = jnp.dot(p_ref[k], w, preferred_element_type=jnp.float32)
        s1 = s1 + jnp.sum(c, axis=0, keepdims=True)
        s2 = s2 + jnp.sum(c * c, axis=0, keepdims=True)
    s1_ref[...] = s1
    s2_ref[...] = s2


def _apply_pool_kernel(p_ref, w_ref, scale_ref, shift_ref, pooled_ref, code_ref):
    """Pass 2 (pooling): conv -> folded-BN scale/shift -> ReLU -> 2x2 max-pool.

    Emits the pooled value and the 2-bit winner code k in {0..3} with (p, q) = (k//2, k%2),
    PyTorch's row-major window-scan order; strict '>' keeps the first maximum (PyTorch tie rule).
    """
    w = w_ref[...]
    scale = scale_ref[...]
    shift = shift_ref[...]

    def act(k):
        c = jnp.dot(p_ref[k], w, preferred_element_type=jnp.float32)
        return jnp.maximum(c * scale + shift, 0.0)

    best = act(0)
    code = jnp.zeros(best.shape, jnp.int32)
    for k in (1, 2, 3):
        v = act(k)
        take = v > best
        best = jnp.where(take, v, best)
        code = jnp.where(take, k, code)

    pooled_ref[...] = best
    code_ref[...] = code


def _apply_kernel(p_ref, w_ref, scale_ref, shift_ref, out_ref):
    """Pass 2 (no pooling): conv -> folded-BN scale/shift -> ReLU."""
    w = w_ref[...]
    scale = scale_ref[...]
    shift = shift_ref[...]
    for k in range(4):
        c = jnp.dot(p_ref[k], w, preferred_element_type=jnp.float32)
        out_ref[k] = jnp.maximum(c * scale + shift, 0.0)


# ---------------------------------------------------------------------------
# Wrapper (layout glue: im2col, padding, BN fold, index reconstruction)
# ---------------------------------------------------------------------------
def _im2col_pq(x):
    """(N, Cin, H, W) -> (4, N*(H//2)*(W//2), 9*Cin) bf16; leading axis ordered (p, q)."""
    N, Cin, H, W = x.shape
    Hh, Wh = H // 2, W // 2
    xp = jnp.pad(x, ((0, 0), (0, 0), (1, 1), (1, 1)))
    blocks = []
    for p in (0, 1):
        for q in (0, 1):
            taps = []
            for dy in range(3):
                for dx in range(3):
                    sl = jax.lax.slice(
                        xp,
                        (0, 0, p + dy, q + dx),
                        (N, Cin, p + dy + 2 * Hh - 1, q + dx + 2 * Wh - 1),
                        (1, 1, 2, 2))                       # (N, Cin, Hh, Wh)
                    taps.append(sl)
            t = jnp.stack(taps, axis=0)                     # (9, N, Cin, Hh, Wh)
            t = jnp.transpose(t, (1, 3, 4, 0, 2))           # (N, Hh, Wh, 9, Cin)
            blocks.append(t.reshape(N * Hh * Wh, 9 * Cin))
    return jnp.stack(blocks, axis=0).astype(jnp.bfloat16)   # (4, Mq, 9*Cin)


def _pick_row_tile(mq, target):
    """Largest multiple of 16 dividing mq that is <= target (full extent if mq <= target)."""
    if mq <= target:
        return mq
    t = target - (target % 16)
    while t >= 16:
        if mq % t == 0:
            return t
        t -= 16
    return mq


def conv_block_forward(x, weight, bias, gamma, beta, *, is_maxpooling=True,
                       eps=1e-5, row_tile=512):
    """Matches conv_block.forward (training-mode BatchNorm batch statistics).

    x: (N, Cin, H, W) float32 NCHW.  Returns NCHW outputs.
    NOTE: `bias` is accepted for interface parity but unused: a per-channel bias before
    BatchNorm is exactly cancelled by the mean subtraction.
    """
    del bias
    N, Cin, H, W = x.shape
    Cout = weight.shape[0]
    assert H % 2 == 0 and W % 2 == 0, "even spatial dims required"
    Hh, Wh = H // 2, W // 2
    Mq = N * Hh * Wh
    K = 9 * Cin
    M_total = 4 * Mq
    Coutp = ((Cout + 127) // 128) * 128      # lane-dense channel padding
    pad_c = Coutp - Cout

    patches3 = _im2col_pq(x)                                              # (4, Mq, K) bf16
    w2d = jnp.transpose(weight, (2, 3, 1, 0)).reshape(K, Cout)
    w2d = jnp.pad(w2d, ((0, 0), (0, pad_c))).astype(jnp.bfloat16)         # (K, Coutp)
    g2d = jnp.pad(gamma.astype(jnp.float32), (0, pad_c)).reshape(1, Coutp)
    be2d = jnp.pad(beta.astype(jnp.float32), (0, pad_c)).reshape(1, Coutp)

    tm = _pick_row_tile(Mq, row_tile)
    n_tiles = Mq // tm

    # ---- pass 1: per-channel conv sufficient statistics (reduction over row tiles) ----
    s1, s2 = pl.pallas_call(
        _conv_stats_kernel,
        out_shape=(jax.ShapeDtypeStruct((1, Coutp), jnp.float32),
                   jax.ShapeDtypeStruct((1, Coutp), jnp.float32)),
        grid=(n_tiles,),
        in_specs=[pl.BlockSpec((4, tm, K), lambda t: (0, t, 0)),
                  pl.BlockSpec((K, Coutp), lambda t: (0, 0))],
        out_specs=(pl.BlockSpec((1, Coutp), lambda t: (0, 0)),
                   pl.BlockSpec((1, Coutp), lambda t: (0, 0))),
        compiler_params=pltpu.CompilerParams(
            dimension_semantics=("arbitrary",),
            vmem_limit_bytes=_VMEM_LIMIT),
    )(patches3, w2d)

    # ---- tiny glue: fold BatchNorm into a single per-channel scale/shift ----
    mean = s1 / M_total
    var = jnp.maximum(s2 / M_total - mean * mean, 0.0)
    scale = g2d * jax.lax.rsqrt(var + eps)                  # (1, Coutp)
    shift = be2d - mean * scale                             # (1, Coutp)

    common_in_specs = [
        pl.BlockSpec((4, tm, K), lambda t: (0, t, 0)),
        pl.BlockSpec((K, Coutp), lambda t: (0, 0)),
        pl.BlockSpec((1, Coutp), lambda t: (0, 0)),
        pl.BlockSpec((1, Coutp), lambda t: (0, 0)),
    ]
    apply_params = pltpu.CompilerParams(
        dimension_semantics=("parallel",),    # independent tiles -> megacore on v7x
        vmem_limit_bytes=_VMEM_LIMIT)

    if is_maxpooling:
        pooled2d, code2d = pl.pallas_call(
            _apply_pool_kernel,
            out_shape=(jax.ShapeDtypeStruct((Mq, Coutp), jnp.float32),
                       jax.ShapeDtypeStruct((Mq, Coutp), jnp.int32)),
            grid=(n_tiles,),
            in_specs=common_in_specs,
            out_specs=(pl.BlockSpec((tm, Coutp), lambda t: (t, 0)),
                       pl.BlockSpec((tm, Coutp), lambda t: (t, 0))),
            compiler_params=apply_params,
        )(patches3, w2d, scale, shift)

        pooled = pooled2d[:, :Cout].reshape(N, Hh, Wh, Cout).transpose(0, 3, 1, 2)
        code = code2d[:, :Cout].reshape(N, Hh, Wh, Cout).transpose(0, 3, 1, 2)
        # Reconstruct PyTorch's flat (H*W) argmax index from the 2-bit (p, q) winner code.
        p = code // 2
        q = code % 2
        ii = jnp.arange(Hh, dtype=jnp.int32).reshape(1, 1, Hh, 1)
        jj = jnp.arange(Wh, dtype=jnp.int32).reshape(1, 1, 1, Wh)
        indices = (2 * ii + p) * W + (2 * jj + q)
        # TODO(synk): PyTorch returns int64 indices; int32 kept here (widen outside if needed).
        return pooled, indices
    else:
        out3 = pl.pallas_call(
            _apply_kernel,
            out_shape=jax.ShapeDtypeStruct((4, Mq, Coutp), jnp.float32),
            grid=(n_tiles,),
            in_specs=common_in_specs,
            out_specs=pl.BlockSpec((4, tm, Coutp), lambda t: (0, t, 0)),
            compiler_params=apply_params,
        )(patches3, w2d, scale, shift)

        r = out3[:, :, :Cout].reshape(2, 2, N, Hh, Wh, Cout)   # (p, q, n, i, j, c)
        r = r.transpose(2, 5, 3, 0, 4, 1).reshape(N, Cout, H, W)
        return r


# ---------------------------------------------------------------------------
# Pure numpy reference (float64) for a sanity check
# ---------------------------------------------------------------------------
def _ref_forward(x, w, b, gamma, beta, eps=1e-5):
    x = np.asarray(x, np.float64)
    w = np.asarray(w, np.float64)
    N, Cin, H, W = x.shape
    Cout = w.shape[0]
    xp = np.pad(x, ((0, 0), (0, 0), (1, 1), (1, 1)))
    conv = np.zeros((N, Cout, H, W), np.float64)
    for dy in range(3):
        for dx in range(3):
            conv += np.einsum('ncij,oc->noij', xp[:, :, dy:dy + H, dx:dx + W], w[:, :, dy, dx])
    conv += np.asarray(b, np.float64)[None, :, None, None]
    mean = conv.mean(axis=(0, 2, 3), keepdims=True)
    var = conv.var(axis=(0, 2, 3), keepdims=True)
    y = (conv - mean) / np.sqrt(var + eps)
    y = y * np.asarray(gamma, np.float64)[None, :, None, None] + \
        np.asarray(beta, np.float64)[None, :, None, None]
    r = np.maximum(y, 0.0)
    pooled = r.reshape(N, Cout, H // 2, 2, W // 2, 2).max(axis=(3, 5))
    return r, pooled


# ---------------------------------------------------------------------------
if __name__ == "__main__":
    N, Cin, Cout, H, W = 2, 4, 8, 16, 16

    key = jax.random.PRNGKey(0)
    kw, kb, kg, kbt, kx = jax.random.split(key, 5)
    weight = 0.2 * jax.random.normal(kw, (Cout, Cin, 3, 3), jnp.float32)
    bias = 0.1 * jax.random.normal(kb, (Cout,), jnp.float32)
    gamma = 1.0 + 0.1 * jax.random.normal(kg, (Cout,), jnp.float32)
    beta = 0.1 * jax.random.normal(kbt, (Cout,), jnp.float32)
    x = jax.random.normal(kx, (N, Cin, H, W), jnp.float32)

    ref_relu, ref_pooled = _ref_forward(x, weight, bias, gamma, beta)

    # is_maxpooling=True (module default): run once with the default (single-tile at this
    # small shape) and once with a forced multi-tile grid to exercise the pipelined path.
    for rt in (512, 32):
        pooled, indices = conv_block_forward(x, weight, bias, gamma, beta,
                                             is_maxpooling=True, row_tile=rt)
        pooled = np.asarray(jax.block_until_ready(pooled))
        indices = np.asarray(jax.block_until_ready(indices))
        assert pooled.shape == (N, Cout, H // 2, W // 2)
        assert indices.shape == (N, Cout, H // 2, W // 2)
        np.testing.assert_allclose(pooled, ref_pooled, atol=2e-2, rtol=2e-2)

        # Index sanity: each index points inside its own 2x2 window...
        ii = np.arange(H // 2)[None, None, :, None]
        jj = np.arange(W // 2)[None, None, None, :]
        assert np.all((indices // W) // 2 == ii)
        assert np.all((indices % W) // 2 == jj)
        # ...and at a (near-)maximal value of the reference pre-pool activation.
        gathered = np.take_along_axis(
            ref_relu.reshape(N, Cout, H * W), indices.reshape(N, Cout, -1), axis=2
        ).reshape(indices.shape)
        np.testing.assert_allclose(gathered, ref_pooled, atol=4e-2, rtol=4e-2)

    # is_maxpooling=False path
    relu_full = conv_block_forward(x, weight, bias, gamma, beta, is_maxpooling=False)
    relu_full = np.asarray(jax.block_until_ready(relu_full))
    assert relu_full.shape == (N, Cout, H, W)
    np.testing.assert_allclose(relu_full, ref_relu, atol=2e-2, rtol=2e-2)

    print("KERNEL_OK")
</pallas_src>

<mosaic_0001>
module attributes {stable_mosaic.version = 11 : i64} {
  func.func @_conv_stats_kernel(%arg0: i32, %arg1: memref<4x128x36xbf16, #tpu.memory_space<vmem>>, %arg2: memref<36x128xbf16, #tpu.memory_space<vmem>>, %arg3: memref<1x128xf32, #tpu.memory_space<vmem>>, %arg4: memref<1x128xf32, #tpu.memory_space<vmem>>) attributes {dimension_semantics = [#tpu.dimension_semantics<arbitrary>], iteration_bounds = array<i64: 1>, scalar_prefetch = 0 : i64, scratch_operands = 0 : i64, tpu.core_type = #tpu.core_type<tc>, window_params = [{transform_indices = @transform_0, window_bounds = array<i64: 4, 128, 36>}, {pipeline_mode = #tpu.pipeline_mode<synchronous>, transform_indices = @transform_1, window_bounds = array<i64: 36, 128>}, {pipeline_mode = #tpu.pipeline_mode<synchronous>, transform_indices = @transform_2, window_bounds = array<i64: 1, 128>}, {pipeline_mode = #tpu.pipeline_mode<synchronous>, transform_indices = @transform_3, window_bounds = array<i64: 1, 128>}]} {
    %c0_i32 = arith.constant 0 : i32
    %0 = arith.cmpi eq, %arg0, %c0_i32 : i32
    %1 = arith.extui %0 : i1 to i32
    %c0_i32_0 = arith.constant 0 : i32
    %2 = arith.cmpi ne, %1, %c0_i32_0 : i32
    scf.if %2 {
      %cst_30 = arith.constant 0.000000e+00 : f32
      %48 = vector.broadcast %cst_30 : f32 to vector<1x128xf32>
      %c0_31 = arith.constant 0 : index
      %c0_32 = arith.constant 0 : index
      %49 = vector.load %arg3[%c0_31, %c0_32] : memref<1x128xf32, #tpu.memory_space<vmem>>, vector<1x128xf32>
      tpu.vector_store %arg3[%c0_31, %c0_32], %48 {strides = array<i32>} : memref<1x128xf32, #tpu.memory_space<vmem>>, vector<1x128xf32>,
      %cst_33 = arith.constant 0.000000e+00 : f32
      %50 = vector.broadcast %cst_33 : f32 to vector<1x128xf32>
      %c0_34 = arith.constant 0 : index
      %c0_35 = arith.constant 0 : index
      %51 = vector.load %arg4[%c0_34, %c0_35] : memref<1x128xf32, #tpu.memory_space<vmem>>, vector<1x128xf32>
      tpu.vector_store %arg4[%c0_34, %c0_35], %50 {strides = array<i32>} : memref<1x128xf32, #tpu.memory_space<vmem>>, vector<1x128xf32>,
    } else {
    }
    %c0 = arith.constant 0 : index
    %c0_1 = arith.constant 0 : index
    %3 = vector.load %arg2[%c0, %c0_1] : memref<36x128xbf16, #tpu.memory_space<vmem>>, vector<36x128xbf16>
    %c0_2 = arith.constant 0 : index
    %c0_3 = arith.constant 0 : index
    %4 = vector.load %arg3[%c0_2, %c0_3] : memref<1x128xf32, #tpu.memory_space<vmem>>, vector<1x128xf32>
    %c0_4 = arith.constant 0 : index
    %c0_5 = arith.constant 0 : index
    %5 = vector.load %arg4[%c0_4, %c0_5] : memref<1x128xf32, #tpu.memory_space<vmem>>, vector<1x128xf32>
    %c0_6 = arith.constant 0 : index
    %c0_7 = arith.constant 0 : index
    %c0_8 = arith.constant 0 : index
    %6 = vector.load %arg1[%c0_6, %c0_7, %c0_8] : memref<4x128x36xbf16, #tpu.memory_space<vmem>>, vector<1x128x36xbf16>
    %7 = vector.shape_cast %6 : vector<1x128x36xbf16> to vector<128x36xbf16>
    %cst = arith.constant dense<0.000000e+00> : vector<128x128xf32>
    %8 = tpu.matmul %7, %3, %cst {dimension_numbers = #tpu.dot_dimension_numbers<[1], [0], [0], [1], [0, 0, 1, 1], [], []>} : vector<128x36xbf16>, vector<36x128xbf16>, vector<128x128xf32> -> vector<128x128xf32>
    %cst_9 = arith.constant dense<0.000000e+00> : vector<128xf32>
    %9 = vector.multi_reduction <add>, %8, %cst_9 [0] : vector<128x128xf32> to vector<128xf32>
    %10 = vector.shape_cast %9 : vector<128xf32> to vector<1x128xf32>
    %11 = arith.addf %4, %10 : vector<1x128xf32>
    %12 = arith.mulf %8, %8 : vector<128x128xf32>
    %cst_10 = arith.constant dense<0.000000e+00> : vector<128xf32>
    %13 = vector.multi_reduction <add>, %12, %cst_10 [0] : vector<128x128xf32> to vector<128xf32>
    %14 = vector.shape_cast %13 : vector<128xf32> to vector<1x128xf32>
    %15 = arith.addf %5, %14 : vector<1x128xf32>
    %c1 = arith.constant 1 : index
    %c0_11 = arith.constant 0 : index
    %c0_12 = arith.constant 0 : index
    %16 = vector.load %arg1[%c1, %c0_11, %c0_12] : memref<4x128x36xbf16, #tpu.memory_space<vmem>>, vector<1x128x36xbf16>
    %17 = vector.shape_cast %16 : vector<1x128x36xbf16> to vector<128x36xbf16>
    %cst_13 = arith.constant dense<0.000000e+00> : vector<128x128xf32>
    %18 = tpu.matmul %17, %3, %cst_13 {dimension_numbers = #tpu.dot_dimension_numbers<[1], [0], [0], [1], [0, 0, 1, 1], [], []>} : vector<128x36xbf16>, vector<36x128xbf16>, vector<128x128xf32> -> vector<128x128xf32>
    %cst_14 = arith.constant dense<0.000000e+00> : vector<128xf32>
    %19 = vector.multi_reduction <add>, %18, %cst_14 [0] : vector<128x128xf32> to vector<128xf32>
    %20 = vector.shape_cast %19 : vector<128xf32> to vector<1x128xf32>
    %21 = arith.addf %11, %20 : vector<1x128xf32>
    %22 = arith.mulf %18, %18 : vector<128x128xf32>
    %cst_15 = arith.constant dense<0.000000e+00> : vector<128xf32>
    %23 = vector.multi_reduction <add>, %22, %cst_15 [0] : vector<128x128xf32> to vector<128xf32>
    %24 = vector.shape_cast %23 : vector<128xf32> to vector<1x128xf32>
    %25 = arith.addf %15, %24 : vector<1x128xf32>
    %c2 = arith.constant 2 : index
    %c0_16 = arith.constant 0 : index
    %c0_17 = arith.constant 0 : index
    %26 = vector.load %arg1[%c2, %c0_16, %c0_17] : memref<4x128x36xbf16, #tpu.memory_space<vmem>>, vector<1x128x36xbf16>
    %27 = vector.shape_cast %26 : vector<1x128x36xbf16> to vector<128x36xbf16>
    %cst_18 = arith.constant dense<0.000000e+00> : vector<128x128xf32>
    %28 = tpu.matmul %27, %3, %cst_18 {dimension_numbers = #tpu.dot_dimension_numbers<[1], [0], [0], [1], [0, 0, 1, 1], [], []>} : vector<128x36xbf16>, vector<36x128xbf16>, vector<128x128xf32> -> vector<128x128xf32>
    %cst_19 = arith.constant dense<0.000000e+00> : vector<128xf32>
    %29 = vector.multi_reduction <add>, %28, %cst_19 [0] : vector<128x128xf32> to vector<128xf32>
    %30 = vector.shape_cast %29 : vector<128xf32> to vector<1x128xf32>
    %31 = arith.addf %21, %30 : vector<1x128xf32>
    %32 = arith.mulf %28, %28 : vector<128x128xf32>
    %cst_20 = arith.constant dense<0.000000e+00> : vector<128xf32>
    %33 = vector.multi_reduction <add>, %32, %cst_20 [0] : vector<128x128xf32> to vector<128xf32>
    %34 = vector.shape_cast %33 : vector<128xf32> to vector<1x128xf32>
    %35 = arith.addf %25, %34 : vector<1x128xf32>
    %c3 = arith.constant 3 : index
    %c0_21 = arith.constant 0 : index
    %c0_22 = arith.constant 0 : index
    %36 = vector.load %arg1[%c3, %c0_21, %c0_22] : memref<4x128x36xbf16, #tpu.memory_space<vmem>>, vector<1x128x36xbf16>
    %37 = vector.shape_cast %36 : vector<1x128x36xbf16> to vector<128x36xbf16>
    %cst_23 = arith.constant dense<0.000000e+00> : vector<128x128xf32>
    %38 = tpu.matmul %37, %3, %cst_23 {dimension_numbers = #tpu.dot_dimension_numbers<[1], [0], [0], [1], [0, 0, 1, 1], [], []>} : vector<128x36xbf16>, vector<36x128xbf16>, vector<128x128xf32> -> vector<128x128xf32>
    %cst_24 = arith.constant dense<0.000000e+00> : vector<128xf32>
    %39 = vector.multi_reduction <add>, %38, %cst_24 [0] : vector<128x128xf32> to vector<128xf32>
    %40 = vector.shape_cast %39 : vector<128xf32> to vector<1x128xf32>
    %41 = arith.addf %31, %40 : vector<1x128xf32>
    %42 = arith.mulf %38, %38 : vector<128x128xf32>
    %cst_25 = arith.constant dense<0.000000e+00> : vector<128xf32>
    %43 = vector.multi_reduction <add>, %42, %cst_25 [0] : vector<128x128xf32> to vector<128xf32>
    %44 = vector.shape_cast %43 : vector<128xf32> to vector<1x128xf32>
    %45 = arith.addf %35, %44 : vector<1x128xf32>
    %c0_26 = arith.constant 0 : index
    %c0_27 = arith.constant 0 : index
    %46 = vector.load %arg3[%c0_26, %c0_27] : memref<1x128xf32, #tpu.memory_space<vmem>>, vector<1x128xf32>
    tpu.vector_store %arg3[%c0_26, %c0_27], %41 {strides = array<i32>} : memref<1x128xf32, #tpu.memory_space<vmem>>, vector<1x128xf32>,
    %c0_28 = arith.constant 0 : index
    %c0_29 = arith.constant 0 : index
    %47 = vector.load %arg4[%c0_28, %c0_29] : memref<1x128xf32, #tpu.memory_space<vmem>>, vector<1x128xf32>
    tpu.vector_store %arg4[%c0_28, %c0_29], %45 {strides = array<i32>} : memref<1x128xf32, #tpu.memory_space<vmem>>, vector<1x128xf32>,
    return
  }
  func.func @transform_0(%arg0: i32) -> (i32, i32, i32) {
    %c0_i32 = arith.constant 0 : i32
    %c0_i32_0 = arith.constant 0 : i32
    %c0_i32_1 = arith.constant 0 : i32
    return %c0_i32, %arg0, %c0_i32_0 : i32, i32, i32
  }
  func.func @transform_1(%arg0: i32) -> (i32, i32) {
    %c0_i32 = arith.constant 0 : i32
    %c0_i32_0 = arith.constant 0 : i32
    %c0_i32_1 = arith.constant 0 : i32
    return %c0_i32, %c0_i32_0 : i32, i32
  }
  func.func @transform_2(%arg0: i32) -> (i32, i32) {
    %c0_i32 = arith.constant 0 : i32
    %c0_i32_0 = arith.constant 0 : i32
    %c0_i32_1 = arith.constant 0 : i32
    return %c0_i32, %c0_i32_0 : i32, i32
  }
  func.func @transform_3(%arg0: i32) -> (i32, i32) {
    %c0_i32 = arith.constant 0 : i32
    %c0_i32_0 = arith.constant 0 : i32
    %c0_i32_1 = arith.constant 0 : i32
    return %c0_i32, %c0_i32_0 : i32, i32
  }
}

</mosaic_0001>

<llo_original>
// kernel: tpu_custom_call.1
$region0: #{tpu_custom_call.1}
  #allocation0 [shape = 'u32[]', space=smem, size = 0x4, offset = 0x4, fixed_abs, tag = 'smem constant byte address 0x4 - core index']
  #allocation1 [shape = 'u32[72,128]{1,0:T(1,128)}', space=vmem, size = 0x9000, scoped, tag = 'internal scratch']
  %s0 = inlined_call_operand.vmem [shape: bf16[4,128,36], index: 0, kind: input, shape index: {}]
  %s1 = inlined_call_operand.vmem [shape: bf16[36,128], index: 1, kind: input, shape index: {}]
  %s2 = inlined_call_operand.hbm [shape: f32[1,128], index: 2, kind: output, shape index: {0}]
  %s3 = inlined_call_operand.hbm [shape: f32[1,128], index: 3, kind: output, shape index: {1}]
  %4 = xla_tuple %s2, %s3
  %s5 = sld [smem:[#allocation0]]
  $region30: #{tpu_custom_call.1} parent=0
    _
  %s7 = ssub.s32 1, %s5
  %s8 = scalar_select 0, %s7, %s5
  $region1: #{tpu_custom_call.1} parent=0
    #allocation2 [shape = 'u8[512]{0}', space=vmem, size = 0x400, scoped, tag = 'output window, operand 0, single buffered']
    #allocation3 [shape = 's32[1]{0}', space=sflag, size = 0x4, scoped, tag = 'scoped memory for tpu_custom_call.1']
    #allocation4 [shape = 'u8[512]{0}', space=vmem, size = 0x400, scoped, tag = 'output window, operand 1, single buffered']
    #allocation5 [shape = 's32[1]{0}', space=sflag, size = 0x4, scoped, tag = 'scoped memory for tpu_custom_call.1']
    %9 = vsyncpa [#allocation3], 0
    %10 = vsyncpa [#allocation5], 0
    // Predicated region
    $region2: #{tpu_custom_call.1} parent=1 // pred_check
      _
    $region3: #{tpu_custom_call.1} parent=1 // pred_check_branch
      %12 = sbr.rel (0) target = $region5
    $region4: #{tpu_custom_call.1} parent=1 // pred_region
      _
    $region5: #{tpu_custom_call.1} parent=1 // pred_fallthru
      _
    // Predicated region
    $region6: #{tpu_custom_call.1} parent=1 // pred_check
      _
    $region7: #{tpu_custom_call.1} parent=1 // pred_check_branch
      %14 = sbr.rel (0) target = $region9
    $region8: #{tpu_custom_call.1} parent=1 // pred_region
      _
    $region9: #{tpu_custom_call.1} parent=1 // pred_fallthru
      _
    %p16 = scmp.eq.s32.totalorder 0, 0
    // Predicated region
    $region10: #{tpu_custom_call.1} parent=1 // pred_check
      %p17 = pneg %p16
    $region11: #{tpu_custom_call.1} parent=1 // pred_check_branch
      %19 = sbr.rel (%p17) target = $region13
    $region12: #{tpu_custom_call.1} parent=1 // pred_region
      %20 = vst [vmem:[#allocation2] sm:$0x1] 0.0
      %21 = vst [vmem:[#allocation4] sm:$0x1] 0.0
    $region13: #{tpu_custom_call.1} parent=1 // pred_fallthru
      _
    %v22 = vld [vmem:[%s1] sm:$0xf]
    %v23 = vld [vmem:[%s1 + $0x4] sm:$0xf]
    %v24 = vld [vmem:[%s1 + $0x8] sm:$0xf]
    %v25 = vld [vmem:[%s1 + $0xc] sm:$0xf]
    %v26 = vld [vmem:[%s1 + $0x10] sm:$0x3]
    %v27 = vld [vmem:[#allocation2] sm:$0x1]
    %v28 = vld [vmem:[#allocation4] sm:$0x1]
    %v29 = vld [vmem:[%s0] sm:$0xf]
    %v30 = vld [vmem:[%s0 + $0x4] sm:$0xf]
    %v31 = vld [vmem:[%s0 + $0x8] sm:$0xf]
    %v32 = vld [vmem:[%s0 + $0xc] sm:$0xf]
    %v33 = vld [vmem:[%s0 + $0x10] sm:$0xf]
    %v34 = vld [vmem:[%s0 + $0x14] sm:$0xf]
    %v35 = vld [vmem:[%s0 + $0x18] sm:$0xf]
    %v36 = vld [vmem:[%s0 + $0x1c] sm:$0xf]
    %v37 = vld [vmem:[%s0 + $0x20] sm:$0xf]
    %v38 = vld [vmem:[%s0 + $0x24] sm:$0xf]
    %v39 = vld [vmem:[%s0 + $0x28] sm:$0xf]
    %v40 = vld [vmem:[%s0 + $0x2c] sm:$0xf]
    %v41 = vld [vmem:[%s0 + $0x30] sm:$0xf]
    %v42 = vld [vmem:[%s0 + $0x34] sm:$0xf]
    %v43 = vld [vmem:[%s0 + $0x38] sm:$0xf]
    %v44 = vld [vmem:[%s0 + $0x3c] sm:$0xf]
    %v61 = vunpack.c.l.b16 %v29
    %v62 = vunpack.c.l.b16 %v30
    %v63 = vunpack.c.l.b16 %v31
    %v64 = vunpack.c.l.b16 %v32
    %v65 = vunpack.c.l.b16 %v33
    %v66 = vunpack.c.l.b16 %v34
    %v67 = vunpack.c.l.b16 %v35
    %v68 = vunpack.c.l.b16 %v36
    %v69 = vunpack.c.l.b16 %v37
    %v70 = vunpack.c.l.b16 %v38
    %v71 = vunpack.c.l.b16 %v39
    %v72 = vunpack.c.l.b16 %v40
    %v73 = vunpack.c.l.b16 %v41
    %v74 = vunpack.c.l.b16 %v42
    %v75 = vunpack.c.l.b16 %v43
    %v76 = vunpack.c.l.b16 %v44
    %v77 = vpack.c.b16 %v62, %v61
    %v78 = vpack.c.b16 %v64, %v63
    %v79 = vpack.c.b16 %v66, %v65
    %v80 = vpack.c.b16 %v68, %v67
    %v81 = vpack.c.b16 %v70, %v69
    %v82 = vpack.c.b16 %v72, %v71
    %v83 = vpack.c.b16 %v74, %v73
    %v84 = vpack.c.b16 %v76, %v75
    %v90 = vunpack.c.l.b16 %v22
    %v91 = vunpack.c.l.b16 %v23
    %v92 = vunpack.c.l.b16 %v24
    %v93 = vunpack.c.l.b16 %v25
    %v94 = vunpack.c.l.b16 %v26
    %v95 = vpack.c.b16 %v91, %v90
    %v96 = vpack.c.b16 %v93, %v92
    %v97 = vpack.c.b16 %v94, %v94
    %vm100 = vcmask 293888
    %v102 = vsel %vm100, %v77, 0
    %v105 = vsel %vm100, %v78, 0
    %v108 = vsel %vm100, %v79, 0
    %v111 = vsel %vm100, %v80, 0
    %v114 = vsel %vm100, %v81, 0
    %v117 = vsel %vm100, %v82, 0
    %v120 = vsel %vm100, %v83, 0
    %v123 = vsel %vm100, %v84, 0
    %vm125 = vcmask 1041408
    %v127 = vsel %vm125, %v97, 0
    %129 = vmatpush.bf16.msra.mxu0 0
    %130 = vmatpush.bf16.msra.mxu0 0
    %131 = vmatpush.bf16.msra.mxu0 0
    %132 = vmatpush.bf16.msra.mxu0 0
    %133 = vmatpush.bf16.msra.mxu0 0
    %134 = vmatpush.bf16.msra.mxu0 %v127
    %135 = vmatpush.bf16.msra.mxu0 %v96
    %136 = vmatpush.bf16.msra.mxu0 %v95
    %137 = vmatmul.bf16.gmra.mxu0 %v102
    %v138 = vpop.f32.mrf.mxu0
    %v139 = vadd.f32 0.0, %v138
    %v140 = vpop.f32.mrf.mxu0
    %v141 = vadd.f32 0.0, %v140
    %142 = vmatmul.bf16.gmra.mxu0 %v105
    %v143 = vpop.f32.mrf.mxu0
    %v144 = vadd.f32 0.0, %v143
    %v145 = vpop.f32.mrf.mxu0
    %v146 = vadd.f32 0.0, %v145
    %147 = vmatmul.bf16.gmra.mxu0 %v108
    %v148 = vpop.f32.mrf.mxu0
    %v149 = vadd.f32 0.0, %v148
    %v150 = vpop.f32.mrf.mxu0
    %v151 = vadd.f32 0.0, %v150
    %152 = vmatmul.bf16.gmra.mxu0 %v111
    %v153 = vpop.f32.mrf.mxu0
    %v154 = vadd.f32 0.0, %v153
    %v155 = vpop.f32.mrf.mxu0
    %v156 = vadd.f32 0.0, %v155
    %157 = vmatmul.bf16.gmra.mxu0 %v114
    %v158 = vpop.f32.mrf.mxu0
    %v159 = vadd.f32 0.0, %v158
    %v160 = vpop.f32.mrf.mxu0
    %v161 = vadd.f32 0.0, %v160
    %162 = vmatmul.bf16.gmra.mxu0 %v117
    %v163 = vpop.f32.mrf.mxu0
    %v164 = vadd.f32 0.0, %v163
    %v165 = vpop.f32.mrf.mxu0
    %v166 = vadd.f32 0.0, %v165
    %167 = vmatmul.bf16.gmra.mxu0 %v120
    %v168 = vpop.f32.mrf.mxu0
    %v169 = vadd.f32 0.0, %v168
    %v170 = vpop.f32.mrf.mxu0
    %v171 = vadd.f32 0.0, %v170
    %172 = vmatmul.bf16.gmra.mxu0 %v123
    %v173 = vpop.f32.mrf.mxu0
    %v174 = vadd.f32 0.0, %v173
    %v175 = vpop.f32.mrf.mxu0
    %v176 = vadd.f32 0.0, %v175
    %177 = vdwg.mxu0
    %v178 = vadd.f32 %v139, %v141
    %v179 = vadd.f32 %v178, %v144
    %v180 = vadd.f32 %v179, %v146
    %v181 = vadd.f32 %v180, %v149
    %v182 = vadd.f32 %v181, %v151
    %v183 = vadd.f32 %v182, %v154
    %v184 = vadd.f32 %v183, %v156
    %v185 = vadd.f32 %v184, %v159
    %v186 = vadd.f32 %v185, %v161
    %v187 = vadd.f32 %v186, %v164
    %v188 = vadd.f32 %v187, %v166
    %v189 = vadd.f32 %v188, %v169
    %v190 = vadd.f32 %v189, %v171
    %v191 = vadd.f32 %v190, %v174
    %v192 = vadd.f32 %v191, %v176
    %v193 = vrot.slane %v192, 4
    %v194 = vadd.f32 %v192, %v193
    %v195 = vrot.slane %v194, 2
    %v196 = vadd.f32 %v194, %v195
    %v197 = vrot.slane %v196, 1
    %v198 = vadd.f32 %v196, %v197
    %v199 = vadd.f32 %v27, %v198
    %v200 = vmul.f32 %v139, %v139
    %v201 = vmul.f32 %v141, %v141
    %v202 = vmul.f32 %v144, %v144
    %v203 = vmul.f32 %v146, %v146
    %v204 = vmul.f32 %v149, %v149
    %v205 = vmul.f32 %v151, %v151
    %v206 = vmul.f32 %v154, %v154
    %v207 = vmul.f32 %v156, %v156
    %v208 = vmul.f32 %v159, %v159
    %v209 = vmul.f32 %v161, %v161
    %v210 = vmul.f32 %v164, %v164
    %v211 = vmul.f32 %v166, %v166
    %v212 = vmul.f32 %v169, %v169
    %v213 = vmul.f32 %v171, %v171
    %v214 = vmul.f32 %v174, %v174
    %v215 = vmul.f32 %v176, %v176
    %v216 = vadd.f32 %v200, %v201
    %v217 = vadd.f32 %v216, %v202
    %v218 = vadd.f32 %v217, %v203
    %v219 = vadd.f32 %v218, %v204
    %v220 = vadd.f32 %v219, %v205
    %v221 = vadd.f32 %v220, %v206
    %v222 = vadd.f32 %v221, %v207
    %v223 = vadd.f32 %v222, %v208
    %v224 = vadd.f32 %v223, %v209
    %v225 = vadd.f32 %v224, %v210
    %v226 = vadd.f32 %v225, %v211
    %v227 = vadd.f32 %v226, %v212
    %v228 = vadd.f32 %v227, %v213
    %v229 = vadd.f32 %v228, %v214
    %v230 = vadd.f32 %v229, %v215
    %v231 = vrot.slane %v230, 4
    %v232 = vadd.f32 %v230, %v231
    %v233 = vrot.slane %v232, 2
    %v234 = vadd.f32 %v232, %v233
    %v235 = vrot.slane %v234, 1
    %v236 = vadd.f32 %v234, %v235
    %v237 = vadd.f32 %v28, %v236
    %s238 = scalar_lea.vmem %s0, 64
    %v239 = vld [vmem:[%s238] sm:$0xf]
    %v240 = vld [vmem:[%s238 + $0x4] sm:$0xf]
    %v241 = vld [vmem:[%s238 + $0x8] sm:$0xf]
    %v242 = vld [vmem:[%s238 + $0xc] sm:$0xf]
    %v243 = vld [vmem:[%s238 + $0x10] sm:$0xf]
    %v244 = vld [vmem:[%s238 + $0x14] sm:$0xf]
    %v245 = vld [vmem:[%s238 + $0x18] sm:$0xf]
    %v246 = vld [vmem:[%s238 + $0x1c] sm:$0xf]
    %v247 = vld [vmem:[%s238 + $0x20] sm:$0xf]
    %v248 = vld [vmem:[%s238 + $0x24] sm:$0xf]
    %v249 = vld [vmem:[%s238 + $0x28] sm:$0xf]
    %v250 = vld [vmem:[%s238 + $0x2c] sm:$0xf]
    %v251 = vld [vmem:[%s238 + $0x30] sm:$0xf]
    %v252 = vld [vmem:[%s238 + $0x34] sm:$0xf]
    %v253 = vld [vmem:[%s238 + $0x38] sm:$0xf]
    %v254 = vld [vmem:[%s238 + $0x3c] sm:$0xf]
    %v271 = vunpack.c.l.b16 %v239
    %v272 = vunpack.c.l.b16 %v240
    %v273 = vunpack.c.l.b16 %v241
    %v274 = vunpack.c.l.b16 %v242
    %v275 = vunpack.c.l.b16 %v243
    %v276 = vunpack.c.l.b16 %v244
    %v277 = vunpack.c.l.b16 %v245
    %v278 = vunpack.c.l.b16 %v246
    %v279 = vunpack.c.l.b16 %v247
    %v280 = vunpack.c.l.b16 %v248
    %v281 = vunpack.c.l.b16 %v249
    %v282 = vunpack.c.l.b16 %v250
    %v283 = vunpack.c.l.b16 %v251
    %v284 = vunpack.c.l.b16 %v252
    %v285 = vunpack.c.l.b16 %v253
    %v286 = vunpack.c.l.b16 %v254
    %v287 = vpack.c.b16 %v272, %v271
    %v288 = vpack.c.b16 %v274, %v273
    %v289 = vpack.c.b16 %v276, %v275
    %v290 = vpack.c.b16 %v278, %v277
    %v291 = vpack.c.b16 %v280, %v279
    %v292 = vpack.c.b16 %v282, %v281
    %v293 = vpack.c.b16 %v284, %v283
    %v294 = vpack.c.b16 %v286, %v285
    %v296 = vsel %vm100, %v287, 0
    %v299 = vsel %vm100, %v288, 0
    %v302 = vsel %vm100, %v289, 0
    %v305 = vsel %vm100, %v290, 0
    %v308 = vsel %vm100, %v291, 0
    %v311 = vsel %vm100, %v292, 0
    %v314 = vsel %vm100, %v293, 0
    %v317 = vsel %vm100, %v294, 0
    %319 = vmatpush.bf16.msra.mxu0 0
    %320 = vmatpush.bf16.msra.mxu0 0
    %321 = vmatpush.bf16.msra.mxu0 0
    %322 = vmatpush.bf16.msra.mxu0 0
    %323 = vmatpush.bf16.msra.mxu0 0
    %324 = vmatpush.bf16.msra.mxu0 %v127
    %325 = vmatpush.bf16.msra.mxu0 %v96
    %326 = vmatpush.bf16.msra.mxu0 %v95
    %327 = vmatmul.bf16.gmra.mxu0 %v296
    %v328 = vpop.f32.mrf.mxu0
    %v329 = vadd.f32 0.0, %v328
    %v330 = vpop.f32.mrf.mxu0
    %v331 = vadd.f32 0.0, %v330
    %332 = vmatmul.bf16.gmra.mxu0 %v299
    %v333 = vpop.f32.mrf.mxu0
    %v334 = vadd.f32 0.0, %v333
    %v335 = vpop.f32.mrf.mxu0
    %v336 = vadd.f32 0.0, %v335
    %337 = vmatmul.bf16.gmra.mxu0 %v302
    %v338 = vpop.f32.mrf.mxu0
    %v339 = vadd.f32 0.0, %v338
    %v340 = vpop.f32.mrf.mxu0
    %v341 = vadd.f32 0.0, %v340
    %342 = vmatmul.bf16.gmra.mxu0 %v305
    %v343 = vpop.f32.mrf.mxu0
    %v344 = vadd.f32 0.0, %v343
    %v345 = vpop.f32.mrf.mxu0
    %v346 = vadd.f32 0.0, %v345
    %347 = vmatmul.bf16.gmra.mxu0 %v308
    %v348 = vpop.f32.mrf.mxu0
    %v349 = vadd.f32 0.0, %v348
    %v350 = vpop.f32.mrf.mxu0
    %v351 = vadd.f32 0.0, %v350
    %352 = vmatmul.bf16.gmra.mxu0 %v311
    %v353 = vpop.f32.mrf.mxu0
    %v354 = vadd.f32 0.0, %v353
    %v355 = vpop.f32.mrf.mxu0
    %v356 = vadd.f32 0.0, %v355
    %357 = vmatmul.bf16.gmra.mxu0 %v314
    %v358 = vpop.f32.mrf.mxu0
    %v359 = vadd.f32 0.0, %v358
    %v360 = vpop.f32.mrf.mxu0
    %v361 = vadd.f32 0.0, %v360
    %362 = vmatmul.bf16.gmra.mxu0 %v317
    %v363 = vpop.f32.mrf.mxu0
    %v364 = vadd.f32 0.0, %v363
    %v365 = vpop.f32.mrf.mxu0
    %v366 = vadd.f32 0.0, %v365
    %367 = vdwg.mxu0
    %v368 = vadd.f32 %v329, %v331
    %v369 = vadd.f32 %v368, %v334
    %v370 = vadd.f32 %v369, %v336
    %v371 = vadd.f32 %v370, %v339
    %v372 = vadd.f32 %v371, %v341
    %v373 = vadd.f32 %v372, %v344
    %v374 = vadd.f32 %v373, %v346
    %v375 = vadd.f32 %v374, %v349
    %v376 = vadd.f32 %v375, %v351
    %v377 = vadd.f32 %v376, %v354
    %v378 = vadd.f32 %v377, %v356
    %v379 = vadd.f32 %v378, %v359
    %v380 = vadd.f32 %v379, %v361
    %v381 = vadd.f32 %v380, %v364
    %v382 = vadd.f32 %v381, %v366
    %v383 = vrot.slane %v382, 4
    %v384 = vadd.f32 %v382, %v383
    %v385 = vrot.slane %v384, 2
    %v386 = vadd.f32 %v384, %v385
    %v387 = vrot.slane %v386, 1
    %v388 = vadd.f32 %v386, %v387
    %v389 = vadd.f32 %v199, %v388
    %v390 = vmul.f32 %v329, %v329
    %v391 = vmul.f32 %v331, %v331
    %v392 = vmul.f32 %v334, %v334
    %v393 = vmul.f32 %v336, %v336
    %v394 = vmul.f32 %v339, %v339
    %v395 = vmul.f32 %v341, %v341
    %v396 = vmul.f32 %v344, %v344
    %v397 = vmul.f32 %v346, %v346
    %v398 = vmul.f32 %v349, %v349
    %v399 = vmul.f32 %v351, %v351
    %v400 = vmul.f32 %v354, %v354
    %v401 = vmul.f32 %v356, %v356
    %v402 = vmul.f32 %v359, %v359
    %v403 = vmul.f32 %v361, %v361
    %v404 = vmul.f32 %v364, %v364
    %v405 = vmul.f32 %v366, %v366
    %v406 = vadd.f32 %v390, %v391
    %v407 = vadd.f32 %v406, %v392
    %v408 = vadd.f32 %v407, %v393
    %v409 = vadd.f32 %v408, %v394
    %v410 = vadd.f32 %v409, %v395
    %v411 = vadd.f32 %v410, %v396
    %v412 = vadd.f32 %v411, %v397
    %v413 = vadd.f32 %v412, %v398
    %v414 = vadd.f32 %v413, %v399
    %v415 = vadd.f32 %v414, %v400
    %v416 = vadd.f32 %v415, %v401
    %v417 = vadd.f32 %v416, %v402
    %v418 = vadd.f32 %v417, %v403
    %v419 = vadd.f32 %v418, %v404
    %v420 = vadd.f32 %v419, %v405
    %v421 = vrot.slane %v420, 4
    %v422 = vadd.f32 %v420, %v421
    %v423 = vrot.slane %v422, 2
    %v424 = vadd.f32 %v422, %v423
    %v425 = vrot.slane %v424, 1
    %v426 = vadd.f32 %v424, %v425
    %v427 = vadd.f32 %v237, %v426
    %s428 = scalar_lea.vmem %s0, 128
    %v429 = vld [vmem:[%s428] sm:$0xf]
    %v430 = vld [vmem:[%s428 + $0x4] sm:$0xf]
    %v431 = vld [vmem:[%s428 + $0x8] sm:$0xf]
    %v432 = vld [vmem:[%s428 + $0xc] sm:$0xf]
    %v433 = vld [vmem:[%s428 + $0x10] sm:$0xf]
    %v434 = vld [vmem:[%s428 + $0x14] sm:$0xf]
    %v435 = vld [vmem:[%s428 + $0x18] sm:$0xf]
    %v436 = vld [vmem:[%s428 + $0x1c] sm:$0xf]
    %v437 = vld [vmem:[%s428 + $0x20] sm:$0xf]
    %v438 = vld [vmem:[%s428 + $0x24] sm:$0xf]
    %v439 = vld [vmem:[%s428 + $0x28] sm:$0xf]
    %v440 = vld [vmem:[%s428 + $0x2c] sm:$0xf]
    %v441 = vld [vmem:[%s428 + $0x30] sm:$0xf]
    %v442 = vld [vmem:[%s428 + $0x34] sm:$0xf]
    %v443 = vld [vmem:[%s428 + $0x38] sm:$0xf]
    %v444 = vld [vmem:[%s428 + $0x3c] sm:$0xf]
    %v461 = vunpack.c.l.b16 %v429
    %v462 = vunpack.c.l.b16 %v430
    %v463 = vunpack.c.l.b16 %v431
    %v464 = vunpack.c.l.b16 %v432
    %v465 = vunpack.c.l.b16 %v433
    %v466 = vunpack.c.l.b16 %v434
    %v467 = vunpack.c.l.b16 %v435
    %v468 = vunpack.c.l.b16 %v436
    %v469 = vunpack.c.l.b16 %v437
    %v470 = vunpack.c.l.b16 %v438
    %v471 = vunpack.c.l.b16 %v439
    %v472 = vunpack.c.l.b16 %v440
    %v473 = vunpack.c.l.b16 %v441
    %v474 = vunpack.c.l.b16 %v442
    %v475 = vunpack.c.l.b16 %v443
    %v476 = vunpack.c.l.b16 %v444
    %v477 = vpack.c.b16 %v462, %v461
    %v478 = vpack.c.b16 %v464, %v463
    %v479 = vpack.c.b16 %v466, %v465
    %v480 = vpack.c.b16 %v468, %v467
    %v481 = vpack.c.b16 %v470, %v469
    %v482 = vpack.c.b16 %v472, %v471
    %v483 = vpack.c.b16 %v474, %v473
    %v484 = vpack.c.b16 %v476, %v475
    %v486 = vsel %vm100, %v477, 0
    %v489 = vsel %vm100, %v478, 0
    %v492 = vsel %vm100, %v479, 0
    %v495 = vsel %vm100, %v480, 0
    %v498 = vsel %vm100, %v481, 0
    %v501 = vsel %vm100, %v482, 0
    %v504 = vsel %vm100, %v483, 0
    %v507 = vsel %vm100, %v484, 0
    %509 = vmatpush.bf16.msra.mxu0 0
    %510 = vmatpush.bf16.msra.mxu0 0
    %511 = vmatpush.bf16.msra.mxu0 0
    %512 = vmatpush.bf16.msra.mxu0 0
    %513 = vmatpush.bf16.msra.mxu0 0
    %514 = vmatpush.bf16.msra.mxu0 %v127
    %515 = vmatpush.bf16.msra.mxu0 %v96
    %516 = vmatpush.bf16.msra.mxu0 %v95
    %517 = vmatmul.bf16.gmra.mxu0 %v486
    %v518 = vpop.f32.mrf.mxu0
    %v519 = vadd.f32 0.0, %v518
    %v520 = vpop.f32.mrf.mxu0
    %v521 = vadd.f32 0.0, %v520
    %522 = vmatmul.bf16.gmra.mxu0 %v489
    %v523 = vpop.f32.mrf.mxu0
    %v524 = vadd.f32 0.0, %v523
    %v525 = vpop.f32.mrf.mxu0
    %v526 = vadd.f32 0.0, %v525
    %527 = vmatmul.bf16.gmra.mxu0 %v492
    %v528 = vpop.f32.mrf.mxu0
    %v529 = vadd.f32 0.0, %v528
    %v530 = vpop.f32.mrf.mxu0
    %v531 = vadd.f32 0.0, %v530
    %532 = vmatmul.bf16.gmra.mxu0 %v495
    %v533 = vpop.f32.mrf.mxu0
    %v534 = vadd.f32 0.0, %v533
    %v535 = vpop.f32.mrf.mxu0
    %v536 = vadd.f32 0.0, %v535
    %537 = vmatmul.bf16.gmra.mxu0 %v498
    %v538 = vpop.f32.mrf.mxu0
    %v539 = vadd.f32 0.0, %v538
    %v540 = vpop.f32.mrf.mxu0
    %v541 = vadd.f32 0.0, %v540
    %542 = vmatmul.bf16.gmra.mxu0 %v501
    %v543 = vpop.f32.mrf.mxu0
    %v544 = vadd.f32 0.0, %v543
    %v545 = vpop.f32.mrf.mxu0
    %v546 = vadd.f32 0.0, %v545
    %547 = vmatmul.bf16.gmra.mxu0 %v504
    %v548 = vpop.f32.mrf.mxu0
    %v549 = vadd.f32 0.0, %v548
    %v550 = vpop.f32.mrf.mxu0
    %v551 = vadd.f32 0.0, %v550
    %552 = vmatmul.bf16.gmra.mxu0 %v507
    %v553 = vpop.f32.mrf.mxu0
    %v554 = vadd.f32 0.0, %v553
    %v555 = vpop.f32.mrf.mxu0
    %v556 = vadd.f32 0.0, %v555
    %557 = vdwg.mxu0
    %v558 = vadd.f32 %v519, %v521
    %v559 = vadd.f32 %v558, %v524
    %v560 = vadd.f32 %v559, %v526
    %v561 = vadd.f32 %v560, %v529
    %v562 = vadd.f32 %v561, %v531
    %v563 = vadd.f32 %v562, %v534
    %v564 = vadd.f32 %v563, %v536
    %v565 = vadd.f32 %v564, %v539
    %v566 = vadd.f32 %v565, %v541
    %v567 = vadd.f32 %v566, %v544
    %v568 = vadd.f32 %v567, %v546
    %v569 = vadd.f32 %v568, %v549
    %v570 = vadd.f32 %v569, %v551
    %v571 = vadd.f32 %v570, %v554
    %v572 = vadd.f32 %v571, %v556
    %v573 = vrot.slane %v572, 4
    %v574 = vadd.f32 %v572, %v573
    %v575 = vrot.slane %v574, 2
    %v576 = vadd.f32 %v574, %v575
    %v577 = vrot.slane %v576, 1
    %v578 = vadd.f32 %v576, %v577
    %v579 = vadd.f32 %v389, %v578
    %v580 = vmul.f32 %v519, %v519
    %v581 = vmul.f32 %v521, %v521
    %v582 = vmul.f32 %v524, %v524
    %v583 = vmul.f32 %v526, %v526
    %v584 = vmul.f32 %v529, %v529
    %v585 = vmul.f32 %v531, %v531
    %v586 = vmul.f32 %v534, %v534
    %v587 = vmul.f32 %v536, %v536
    %v588 = vmul.f32 %v539, %v539
    %v589 = vmul.f32 %v541, %v541
    %v590 = vmul.f32 %v544, %v544
    %v591 = vmul.f32 %v546, %v546
    %v592 = vmul.f32 %v549, %v549
    %v593 = vmul.f32 %v551, %v551
    %v594 = vmul.f32 %v554, %v554
    %v595 = vmul.f32 %v556, %v556
    %v596 = vadd.f32 %v580, %v581
    %v597 = vadd.f32 %v596, %v582
    %v598 = vadd.f32 %v597, %v583
    %v599 = vadd.f32 %v598, %v584
    %v600 = vadd.f32 %v599, %v585
    %v601 = vadd.f32 %v600, %v586
    %v602 = vadd.f32 %v601, %v587
    %v603 = vadd.f32 %v602, %v588
    %v604 = vadd.f32 %v603, %v589
    %v605 = vadd.f32 %v604, %v590
    %v606 = vadd.f32 %v605, %v591
    %v607 = vadd.f32 %v606, %v592
    %v608 = vadd.f32 %v607, %v593
    %v609 = vadd.f32 %v608, %v594
    %v610 = vadd.f32 %v609, %v595
    %v611 = vrot.slane %v610, 4
    %v612 = vadd.f32 %v610, %v611
    %v613 = vrot.slane %v612, 2
    %v614 = vadd.f32 %v612, %v613
    %v615 = vrot.slane %v614, 1
    %v616 = vadd.f32 %v614, %v615
    %v617 = vadd.f32 %v427, %v616
    %s618 = scalar_lea.vmem %s0, 192
    %v619 = vld [vmem:[%s618] sm:$0xf]
    %v620 = vld [vmem:[%s618 + $0x4] sm:$0xf]
    %v621 = vld [vmem:[%s618 + $0x8] sm:$0xf]
    %v622 = vld [vmem:[%s618 + $0xc] sm:$0xf]
    %v623 = vld [vmem:[%s618 + $0x10] sm:$0xf]
    %v624 = vld [vmem:[%s618 + $0x14] sm:$0xf]
    %v625 = vld [vmem:[%s618 + $0x18] sm:$0xf]
    %v626 = vld [vmem:[%s618 + $0x1c] sm:$0xf]
    %v627 = vld [vmem:[%s618 + $0x20] sm:$0xf]
    %v628 = vld [vmem:[%s618 + $0x24] sm:$0xf]
    %v629 = vld [vmem:[%s618 + $0x28] sm:$0xf]
    %v630 = vld [vmem:[%s618 + $0x2c] sm:$0xf]
    %v631 = vld [vmem:[%s618 + $0x30] sm:$0xf]
    %v632 = vld [vmem:[%s618 + $0x34] sm:$0xf]
    %v633 = vld [vmem:[%s618 + $0x38] sm:$0xf]
    %v634 = vld [vmem:[%s618 + $0x3c] sm:$0xf]
    %v651 = vunpack.c.l.b16 %v619
    %v652 = vunpack.c.l.b16 %v620
    %v653 = vunpack.c.l.b16 %v621
    %v654 = vunpack.c.l.b16 %v622
    %v655 = vunpack.c.l.b16 %v623
    %v656 = vunpack.c.l.b16 %v624
    %v657 = vunpack.c.l.b16 %v625
    %v658 = vunpack.c.l.b16 %v626
    %v659 = vunpack.c.l.b16 %v627
    %v660 = vunpack.c.l.b16 %v628
    %v661 = vunpack.c.l.b16 %v629
    %v662 = vunpack.c.l.b16 %v630
    %v663 = vunpack.c.l.b16 %v631
    %v664 = vunpack.c.l.b16 %v632
    %v665 = vunpack.c.l.b16 %v633
    %v666 = vunpack.c.l.b16 %v634
    %v667 = vpack.c.b16 %v652, %v651
    %v668 = vpack.c.b16 %v654, %v653
    %v669 = vpack.c.b16 %v656, %v655
    %v670 = vpack.c.b16 %v658, %v657
    %v671 = vpack.c.b16 %v660, %v659
    %v672 = vpack.c.b16 %v662, %v661
    %v673 = vpack.c.b16 %v664, %v663
    %v674 = vpack.c.b16 %v666, %v665
    %v676 = vsel %vm100, %v667, 0
    %v679 = vsel %vm100, %v668, 0
    %v682 = vsel %vm100, %v669, 0
    %v685 = vsel %vm100, %v670, 0
    %v688 = vsel %vm100, %v671, 0
    %v691 = vsel %vm100, %v672, 0
    %v694 = vsel %vm100, %v673, 0
    %v697 = vsel %vm100, %v674, 0
    %699 = vmatpush.bf16.msra.mxu0 0
    %700 = vmatpush.bf16.msra.mxu0 0
    %701 = vmatpush.bf16.msra.mxu0 0
    %702 = vmatpush.bf16.msra.mxu0 0
    %703 = vmatpush.bf16.msra.mxu0 0
    %704 = vmatpush.bf16.msra.mxu0 %v127
    %705 = vmatpush.bf16.msra.mxu0 %v96
    %706 = vmatpush.bf16.msra.mxu0 %v95
    %707 = vmatmul.bf16.gmra.mxu0 %v676
    %v708 = vpop.f32.mrf.mxu0
    %v709 = vadd.f32 0.0, %v708
    %v710 = vpop.f32.mrf.mxu0
    %v711 = vadd.f32 0.0, %v710
    %712 = vmatmul.bf16.gmra.mxu0 %v679
    %v713 = vpop.f32.mrf.mxu0
    %v714 = vadd.f32 0.0, %v713
    %v715 = vpop.f32.mrf.mxu0
    %v716 = vadd.f32 0.0, %v715
    %717 = vmatmul.bf16.gmra.mxu0 %v682
    %v718 = vpop.f32.mrf.mxu0
    %v719 = vadd.f32 0.0, %v718
    %v720 = vpop.f32.mrf.mxu0
    %v721 = vadd.f32 0.0, %v720
    %722 = vmatmul.bf16.gmra.mxu0 %v685
    %v723 = vpop.f32.mrf.mxu0
    %v724 = vadd.f32 0.0, %v723
    %v725 = vpop.f32.mrf.mxu0
    %v726 = vadd.f32 0.0, %v725
    %727 = vmatmul.bf16.gmra.mxu0 %v688
    %v728 = vpop.f32.mrf.mxu0
    %v729 = vadd.f32 0.0, %v728
    %v730 = vpop.f32.mrf.mxu0
    %v731 = vadd.f32 0.0, %v730
    %732 = vmatmul.bf16.gmra.mxu0 %v691
    %v733 = vpop.f32.mrf.mxu0
    %v734 = vadd.f32 0.0, %v733
    %v735 = vpop.f32.mrf.mxu0
    %v736 = vadd.f32 0.0, %v735
    %737 = vmatmul.bf16.gmra.mxu0 %v694
    %v738 = vpop.f32.mrf.mxu0
    %v739 = vadd.f32 0.0, %v738
    %v740 = vpop.f32.mrf.mxu0
    %v741 = vadd.f32 0.0, %v740
    %742 = vmatmul.bf16.gmra.mxu0 %v697
    %v743 = vpop.f32.mrf.mxu0
    %v744 = vadd.f32 0.0, %v743
    %v745 = vpop.f32.mrf.mxu0
    %v746 = vadd.f32 0.0, %v745
    %747 = vdwg.mxu0
    %v748 = vadd.f32 %v709, %v711
    %v749 = vadd.f32 %v748, %v714
    %v750 = vadd.f32 %v749, %v716
    %v751 = vadd.f32 %v750, %v719
    %v752 = vadd.f32 %v751, %v721
    %v753 = vadd.f32 %v752, %v724
    %v754 = vadd.f32 %v753, %v726
    %v755 = vadd.f32 %v754, %v729
    %v756 = vadd.f32 %v755, %v731
    %v757 = vadd.f32 %v756, %v734
    %v758 = vadd.f32 %v757, %v736
    %v759 = vadd.f32 %v758, %v739
    %v760 = vadd.f32 %v759, %v741
    %v761 = vadd.f32 %v760, %v744
    %v762 = vadd.f32 %v761, %v746
    %v763 = vrot.slane %v762, 4
    %v764 = vadd.f32 %v762, %v763
    %v765 = vrot.slane %v764, 2
    %v766 = vadd.f32 %v764, %v765
    %v767 = vrot.slane %v766, 1
    %v768 = vadd.f32 %v766, %v767
    %v769 = vadd.f32 %v579, %v768
    %v770 = vmul.f32 %v709, %v709
    %v771 = vmul.f32 %v711, %v711
    %v772 = vmul.f32 %v714, %v714
    %v773 = vmul.f32 %v716, %v716
    %v774 = vmul.f32 %v719, %v719
    %v775 = vmul.f32 %v721, %v721
    %v776 = vmul.f32 %v724, %v724
    %v777 = vmul.f32 %v726, %v726
    %v778 = vmul.f32 %v729, %v729
    %v779 = vmul.f32 %v731, %v731
    %v780 = vmul.f32 %v734, %v734
    %v781 = vmul.f32 %v736, %v736
    %v782 = vmul.f32 %v739, %v739
    %v783 = vmul.f32 %v741, %v741
    %v784 = vmul.f32 %v744, %v744
    %v785 = vmul.f32 %v746, %v746
    %v786 = vadd.f32 %v770, %v771
    %v787 = vadd.f32 %v786, %v772
    %v788 = vadd.f32 %v787, %v773
    %v789 = vadd.f32 %v788, %v774
    %v790 = vadd.f32 %v789, %v775
    %v791 = vadd.f32 %v790, %v776
    %v792 = vadd.f32 %v791, %v777
    %v793 = vadd.f32 %v792, %v778
    %v794 = vadd.f32 %v793, %v779
    %v795 = vadd.f32 %v794, %v780
    %v796 = vadd.f32 %v795, %v781
    %v797 = vadd.f32 %v796, %v782
    %v798 = vadd.f32 %v797, %v783
    %v799 = vadd.f32 %v798, %v784
    %v800 = vadd.f32 %v799, %v785
    %v801 = vrot.slane %v800, 4
    %v802 = vadd.f32 %v800, %v801
    %v803 = vrot.slane %v802, 2
    %v804 = vadd.f32 %v802, %v803
    %v805 = vrot.slane %v804, 1
    %v806 = vadd.f32 %v804, %v805
    %v807 = vadd.f32 %v617, %v806
    %808 = vst [vmem:[#allocation2] sm:$0x1] %v769
    %809 = vst [vmem:[#allocation4] sm:$0x1] %v807
    // Predicated region
    $region14: #{tpu_custom_call.1} parent=1 // pred_check
      _
    $region15: #{tpu_custom_call.1} parent=1 // pred_check_branch
      %811 = sbr.rel (0) target = $region17
    $region16: #{tpu_custom_call.1} parent=1 // pred_region
      %813 = vsyncadd [#allocation3], 0
      %s815 = sshll.u32 [#allocation2], 4
      %s816 = int_to_ptr.vmem [resolvable:$true] %s815
      %s817 = sshll.u32 %s2, 4
      %s818 = int_to_ptr.hbm [resolvable:$true] %s817
      %820 = dma.vmem_to_hbm [thread:$0]  %s816, 16, %s818, [#allocation3]
    $region17: #{tpu_custom_call.1} parent=1 // pred_fallthru
      _
    // Predicated region
    $region18: #{tpu_custom_call.1} parent=1 // pred_check
      _
    $region19: #{tpu_custom_call.1} parent=1 // pred_check_branch
      %822 = sbr.rel (0) target = $region21
    $region20: #{tpu_custom_call.1} parent=1 // pred_region
      %824 = vsyncadd [#allocation5], 0
      %s826 = sshll.u32 [#allocation4], 4
      %s827 = int_to_ptr.vmem [resolvable:$true] %s826
      %s828 = sshll.u32 %s3, 4
      %s829 = int_to_ptr.hbm [resolvable:$true] %s828
      %831 = dma.vmem_to_hbm [thread:$0]  %s827, 16, %s829, [#allocation5]
    $region21: #{tpu_custom_call.1} parent=1 // pred_fallthru
      _
    // Predicated region
    $region22: #{tpu_custom_call.1} parent=1 // pred_check
      _
    $region23: #{tpu_custom_call.1} parent=1 // pred_check_branch
      %833 = sbr.rel (0) target = $region25
    $region24: #{tpu_custom_call.1} parent=1 // pred_region
      %835 = dma.done [#allocation3], 16
    $region25: #{tpu_custom_call.1} parent=1 // pred_fallthru
      _
    // Predicated region
    $region26: #{tpu_custom_call.1} parent=1 // pred_check
      _
    $region27: #{tpu_custom_call.1} parent=1 // pred_check_branch
      %837 = sbr.rel (0) target = $region29
    $region28: #{tpu_custom_call.1} parent=1 // pred_region
      %839 = dma.done [#allocation5], 16
    $region29: #{tpu_custom_call.1} parent=1 // pred_fallthru
      _
    %840 = vsyncpa [#allocation3], 1
    %841 = vsyncpa [#allocation5], 1

</llo_original>
